<compile_context>
chip_gen: v6e
topology: v6e:2x2x1
jax: 0.10.0
libtpu: 0.0.40
codegen_flags: <defaults>
</compile_context>

<pallas_src>
import jax
import jax.numpy as jnp
from jax.experimental import pallas as pl
from jax.experimental.pallas import tpu as pltpu


def residual_block_kernel(x_ref, w1_ref, w2_ref, s1_ref, b1_ref, s2_ref,
                          b2_ref, out_ref, pad_ref):
    """One block of `nb` batch elements per grid step.

    x_ref   : (nb, H, W*C)    unpadded, lane-dense input
    w*_ref  : (3, W*C, W*C)   block-banded conv weights (one matrix per kh tap)
    s*/b*   : (1, W*C)        folded BatchNorm scale / bias (tiled over W)
    out_ref : (nb, H, W*C)
    pad_ref : VMEM scratch (nb, H+2, W*C): conv input with H-halo rows
    """
    nb, H, WC = out_ref.shape
    nbh = nb * H

    # Re-zero only the two halo rows each step (cheap, and safe even when the
    # batch axis is sharded across cores); the interior is always overwritten
    # before it is read.
    zrow = jnp.zeros((nb, 1, WC), jnp.float32)
    pad_ref[:, 0:1, :] = zrow
    pad_ref[:, H + 1:H + 2, :] = zrow

    xv = x_ref[...]                        # (nb, H, WC)
    x_flat = xv.reshape(nbh, WC)

    def conv3x3(w_ref):
        # pad_ref rows 1..H hold the conv input; rows 0 and H+1 are zero halo.
        padv = pad_ref[...]                # (nb, H+2, WC)
        acc = None
        for kh in range(3):                # 3 lane-dense MXU matmuls, K = W*C
            win = padv[:, kh:kh + H, :].reshape(nbh, WC)
            term = jnp.dot(win, w_ref[kh], preferred_element_type=jnp.float32)
            acc = term if acc is None else acc + term
        return acc

    # ---- conv1 -> bn1 -> relu
    pad_ref[:, 1:H + 1, :] = xv
    y1 = jnp.maximum(conv3x3(w1_ref) * s1_ref[...] + b1_ref[...], 0.0)

    # ---- conv2 -> bn2 -> identity shortcut -> relu
    pad_ref[:, 1:H + 1, :] = y1.reshape(nb, H, WC)
    y2 = conv3x3(w2_ref) * s2_ref[...] + b2_ref[...]
    out = jnp.maximum(y2 + x_flat, 0.0)
    out_ref[...] = out.reshape(nb, H, WC).astype(out_ref.dtype)


def pack_conv3x3(w_oihw, W):
    """OIHW (C,C,3,3) conv weights -> block-banded (3, W*C, W*C) matrices.

    big[kh][(j+kw-1)*C + ci, j*C + co] = w[co, ci, kh, kw]; out-of-range kw
    taps are simply absent (this folds the W-direction zero padding into the
    weight matrix), so a 3x3 conv over an NHWC row flattened to length W*C is
        out_row(i) = sum_kh  in_row(i + kh - 1) @ big[kh]
    with only the H-direction halo left to the kernel.
    """
    w_hwio = jnp.transpose(w_oihw, (2, 3, 1, 0)).astype(jnp.float32)  # (3,3,Ci,Co)
    idx = jnp.arange(W)
    taps = []
    for kh in range(3):
        m = sum(jnp.kron((idx[:, None] == idx[None, :] + (kw - 1)
                          ).astype(jnp.float32), w_hwio[kh, kw])
                for kw in range(3))
        taps.append(m)
    return jnp.stack(taps)                 # (3, W*C, W*C)


def _pick_batch_block(n):
    for nb in (8, 4, 2, 1):
        if n % nb == 0:
            return nb
    return 1


@jax.jit
def residual_block(x_nchw, w1_oihw, w2_oihw, s1, b1, s2, b2):
    """Pallas-backed ResidualBlock forward. Input/output are NCHW float32."""
    N, C, H, W = x_nchw.shape
    assert w1_oihw.shape == (C, C, 3, 3) and w2_oihw.shape == (C, C, 3, 3), (
        "identity-shortcut ResidualBlock requires out_channels == in_channels")
    WC = W * C
    nb = _pick_batch_block(N)

    # NCHW -> lane-dense (N, H, W*C). No HBM-side spatial padding.
    x2d = jnp.transpose(x_nchw, (0, 2, 3, 1)).reshape(N, H, WC).astype(jnp.float32)

    big1 = pack_conv3x3(w1_oihw, W)
    big2 = pack_conv3x3(w2_oihw, W)

    # Tile per-channel BN scale/bias across W so they broadcast over lanes.
    s1t = jnp.tile(s1.reshape(1, C).astype(jnp.float32), (1, W))
    b1t = jnp.tile(b1.reshape(1, C).astype(jnp.float32), (1, W))
    s2t = jnp.tile(s2.reshape(1, C).astype(jnp.float32), (1, W))
    b2t = jnp.tile(b2.reshape(1, C).astype(jnp.float32), (1, W))

    out2d = pl.pallas_call(
        residual_block_kernel,
        out_shape=jax.ShapeDtypeStruct((N, H, WC), jnp.float32),
        grid_spec=pltpu.PrefetchScalarGridSpec(
            num_scalar_prefetch=0,
            grid=(N // nb,),
            in_specs=[
                pl.BlockSpec((nb, H, WC), lambda n: (n, 0, 0)),
                pl.BlockSpec((3, WC, WC), lambda n: (0, 0, 0)),
                pl.BlockSpec((3, WC, WC), lambda n: (0, 0, 0)),
                pl.BlockSpec((1, WC), lambda n: (0, 0)),
                pl.BlockSpec((1, WC), lambda n: (0, 0)),
                pl.BlockSpec((1, WC), lambda n: (0, 0)),
                pl.BlockSpec((1, WC), lambda n: (0, 0)),
            ],
            out_specs=pl.BlockSpec((nb, H, WC), lambda n: (n, 0, 0)),
            scratch_shapes=[pltpu.VMEM((nb, H + 2, WC), jnp.float32)],
        ),
        compiler_params=pltpu.CompilerParams(
            dimension_semantics=("parallel",)),
    )(x2d, big1, big2, s1t, b1t, s2t, b2t)

    # (N, H, W*C) -> NCHW to match the PyTorch module.
    return jnp.transpose(out2d.reshape(N, H, W, C), (0, 3, 1, 2))


def fold_bn(gamma, beta, mean, var, eps=1e-5):
    """Fold BatchNorm (inference) into per-channel scale/bias, shaped (1, C)."""
    scale = gamma / jnp.sqrt(var + eps)
    bias = beta - mean * scale
    return (scale.reshape(1, -1).astype(jnp.float32),
            bias.reshape(1, -1).astype(jnp.float32))


def reference_forward(x, w1, w2, s1, b1, s2, b2):
    """Pure-JAX NCHW reference for correctness checking."""
    dn = jax.lax.conv_dimension_numbers(x.shape, w1.shape,
                                        ("NCHW", "OIHW", "NCHW"))
    out = jax.lax.conv_general_dilated(x, w1, (1, 1), ((1, 1), (1, 1)),
                                       dimension_numbers=dn)
    out = out * s1.reshape(1, -1, 1, 1) + b1.reshape(1, -1, 1, 1)
    out = jnp.maximum(out, 0.0)
    out = jax.lax.conv_general_dilated(out, w2, (1, 1), ((1, 1), (1, 1)),
                                       dimension_numbers=dn)
    out = out * s2.reshape(1, -1, 1, 1) + b2.reshape(1, -1, 1, 1)
    out = out + x  # identity shortcut (stride=1, in_channels == out_channels)
    return jnp.maximum(out, 0.0)


if __name__ == "__main__":
    N, C, H, W = 2, 8, 16, 16   # W*C = 128 -> fully lane-dense layout

    key = jax.random.PRNGKey(0)
    kx, kw1, kw2, kg1, kb1, km1, kv1, kg2, kb2, km2, kv2 = jax.random.split(key, 11)

    # Input (NCHW, as the PyTorch module expects).
    x = jax.random.normal(kx, (N, C, H, W), dtype=jnp.float32)

    # Conv weights (OIHW), bias=False, matching nn.Conv2d(..., bias=False).
    fan_in = C * 3 * 3
    w1 = jax.random.normal(kw1, (C, C, 3, 3), dtype=jnp.float32) * (2.0 / fan_in) ** 0.5
    w2 = jax.random.normal(kw2, (C, C, 3, 3), dtype=jnp.float32) * (2.0 / fan_in) ** 0.5

    # BatchNorm params / running stats (deterministic, non-trivial).
    g1 = 1.0 + 0.1 * jax.random.normal(kg1, (C,), dtype=jnp.float32)
    be1 = 0.1 * jax.random.normal(kb1, (C,), dtype=jnp.float32)
    m1 = 0.1 * jax.random.normal(km1, (C,), dtype=jnp.float32)
    v1 = 0.5 + jnp.abs(jax.random.normal(kv1, (C,), dtype=jnp.float32))
    g2 = 1.0 + 0.1 * jax.random.normal(kg2, (C,), dtype=jnp.float32)
    be2 = 0.1 * jax.random.normal(kb2, (C,), dtype=jnp.float32)
    m2 = 0.1 * jax.random.normal(km2, (C,), dtype=jnp.float32)
    v2 = 0.5 + jnp.abs(jax.random.normal(kv2, (C,), dtype=jnp.float32))

    s1, b1 = fold_bn(g1, be1, m1, v1)
    s2, b2 = fold_bn(g2, be2, m2, v2)

    out = residual_block(x, w1, w2, s1, b1, s2, b2)
    out = jax.block_until_ready(out)

    ref = reference_forward(x, w1, w2, s1, b1, s2, b2)
    ref = jax.block_until_ready(ref)

    assert out.shape == (N, C, H, W), out.shape
    assert jnp.allclose(out, ref, rtol=1e-4, atol=1e-4), (
        float(jnp.max(jnp.abs(out - ref))))

    print("KERNEL_OK")
</pallas_src>

<mosaic_0001>
module attributes {stable_mosaic.version = 11 : i64} {
  func.func @residual_block_kernel(%arg0: i32, %arg1: memref<2x16x128xf32, #tpu.memory_space<vmem>>, %arg2: memref<3x128x128xf32, #tpu.memory_space<vmem>>, %arg3: memref<3x128x128xf32, #tpu.memory_space<vmem>>, %arg4: memref<1x128xf32, #tpu.memory_space<vmem>>, %arg5: memref<1x128xf32, #tpu.memory_space<vmem>>, %arg6: memref<1x128xf32, #tpu.memory_space<vmem>>, %arg7: memref<1x128xf32, #tpu.memory_space<vmem>>, %arg8: memref<2x16x128xf32, #tpu.memory_space<vmem>>, %arg9: memref<2x18x128xf32, #tpu.memory_space<vmem>>) attributes {dimension_semantics = [#tpu.dimension_semantics<parallel>], iteration_bounds = array<i64: 1>, scalar_prefetch = 0 : i64, scratch_operands = 1 : i64, tpu.core_type = #tpu.core_type<tc>, window_params = [{transform_indices = @transform_0, window_bounds = array<i64: 2, 16, 128>}, {pipeline_mode = #tpu.pipeline_mode<synchronous>, transform_indices = @transform_1, window_bounds = array<i64: 3, 128, 128>}, {pipeline_mode = #tpu.pipeline_mode<synchronous>, transform_indices = @transform_2, window_bounds = array<i64: 3, 128, 128>}, {pipeline_mode = #tpu.pipeline_mode<synchronous>, transform_indices = @transform_3, window_bounds = array<i64: 1, 128>}, {pipeline_mode = #tpu.pipeline_mode<synchronous>, transform_indices = @transform_4, window_bounds = array<i64: 1, 128>}, {pipeline_mode = #tpu.pipeline_mode<synchronous>, transform_indices = @transform_5, window_bounds = array<i64: 1, 128>}, {pipeline_mode = #tpu.pipeline_mode<synchronous>, transform_indices = @transform_6, window_bounds = array<i64: 1, 128>}, {transform_indices = @transform_7, window_bounds = array<i64: 2, 16, 128>}]} {
    %cst = arith.constant 0.000000e+00 : f32
    %0 = vector.broadcast %cst : f32 to vector<2x1x128xf32>
    %c0 = arith.constant 0 : index
    %c0_0 = arith.constant 0 : index
    %c0_1 = arith.constant 0 : index
    %1 = vector.load %arg9[%c0, %c0_0, %c0_1] : memref<2x18x128xf32, #tpu.memory_space<vmem>>, vector<2x1x128xf32>
    tpu.vector_store %arg9[%c0, %c0_0, %c0_1], %0 {strides = array<i32>} : memref<2x18x128xf32, #tpu.memory_space<vmem>>, vector<2x1x128xf32>,
    %c0_2 = arith.constant 0 : index
    %c17 = arith.constant 17 : index
    %c0_3 = arith.constant 0 : index
    %2 = vector.load %arg9[%c0_2, %c17, %c0_3] : memref<2x18x128xf32, #tpu.memory_space<vmem>>, vector<2x1x128xf32>
    tpu.vector_store %arg9[%c0_2, %c17, %c0_3], %0 {strides = array<i32>} : memref<2x18x128xf32, #tpu.memory_space<vmem>>, vector<2x1x128xf32>,
    %c0_4 = arith.constant 0 : index
    %c0_5 = arith.constant 0 : index
    %c0_6 = arith.constant 0 : index
    %3 = vector.load %arg1[%c0_4, %c0_5, %c0_6] : memref<2x16x128xf32, #tpu.memory_space<vmem>>, vector<2x16x128xf32>
    %4 = vector.shape_cast %3 : vector<2x16x128xf32> to vector<32x128xf32>
    %c0_7 = arith.constant 0 : index
    %c1 = arith.constant 1 : index
    %c0_8 = arith.constant 0 : index
    %5 = vector.load %arg9[%c0_7, %c1, %c0_8] : memref<2x18x128xf32, #tpu.memory_space<vmem>>, vector<2x16x128xf32>
    tpu.vector_store %arg9[%c0_7, %c1, %c0_8], %3 {strides = array<i32>} : memref<2x18x128xf32, #tpu.memory_space<vmem>>, vector<2x16x128xf32>,
    %c0_9 = arith.constant 0 : index
    %c0_10 = arith.constant 0 : index
    %c0_11 = arith.constant 0 : index
    %6 = vector.load %arg9[%c0_9, %c0_10, %c0_11] : memref<2x18x128xf32, #tpu.memory_space<vmem>>, vector<2x18x128xf32>
    %7 = vector.extract_strided_slice %6 {offsets = [0, 0, 0], sizes = [2, 16, 128], strides = [1, 1, 1]} : vector<2x18x128xf32> to vector<2x16x128xf32>
    %8 = vector.shape_cast %7 : vector<2x16x128xf32> to vector<32x128xf32>
    %c0_12 = arith.constant 0 : index
    %c0_13 = arith.constant 0 : index
    %c0_14 = arith.constant 0 : index
    %9 = vector.load %arg2[%c0_12, %c0_13, %c0_14] : memref<3x128x128xf32, #tpu.memory_space<vmem>>, vector<1x128x128xf32>
    %10 = vector.shape_cast %9 : vector<1x128x128xf32> to vector<128x128xf32>
    %cst_15 = arith.constant dense<0.000000e+00> : vector<32x128xf32>
    %11 = tpu.matmul %8, %10, %cst_15 {dimension_numbers = #tpu.dot_dimension_numbers<[1], [0], [0], [1], [0, 0, 1, 1], [], []>} : vector<32x128xf32>, vector<128x128xf32>, vector<32x128xf32> -> vector<32x128xf32>
    %12 = vector.extract_strided_slice %6 {offsets = [0, 1, 0], sizes = [2, 16, 128], strides = [1, 1, 1]} : vector<2x18x128xf32> to vector<2x16x128xf32>
    %13 = vector.shape_cast %12 : vector<2x16x128xf32> to vector<32x128xf32>
    %c1_16 = arith.constant 1 : index
    %c0_17 = arith.constant 0 : index
    %c0_18 = arith.constant 0 : index
    %14 = vector.load %arg2[%c1_16, %c0_17, %c0_18] : memref<3x128x128xf32, #tpu.memory_space<vmem>>, vector<1x128x128xf32>
    %15 = vector.shape_cast %14 : vector<1x128x128xf32> to vector<128x128xf32>
    %cst_19 = arith.constant dense<0.000000e+00> : vector<32x128xf32>
    %16 = tpu.matmul %13, %15, %cst_19 {dimension_numbers = #tpu.dot_dimension_numbers<[1], [0], [0], [1], [0, 0, 1, 1], [], []>} : vector<32x128xf32>, vector<128x128xf32>, vector<32x128xf32> -> vector<32x128xf32>
    %17 = arith.addf %11, %16 : vector<32x128xf32>
    %18 = vector.extract_strided_slice %6 {offsets = [0, 2, 0], sizes = [2, 16, 128], strides = [1, 1, 1]} : vector<2x18x128xf32> to vector<2x16x128xf32>
    %19 = vector.shape_cast %18 : vector<2x16x128xf32> to vector<32x128xf32>
    %c2 = arith.constant 2 : index
    %c0_20 = arith.constant 0 : index
    %c0_21 = arith.constant 0 : index
    %20 = vector.load %arg2[%c2, %c0_20, %c0_21] : memref<3x128x128xf32, #tpu.memory_space<vmem>>, vector<1x128x128xf32>
    %21 = vector.shape_cast %20 : vector<1x128x128xf32> to vector<128x128xf32>
    %cst_22 = arith.constant dense<0.000000e+00> : vector<32x128xf32>
    %22 = tpu.matmul %19, %21, %cst_22 {dimension_numbers = #tpu.dot_dimension_numbers<[1], [0], [0], [1], [0, 0, 1, 1], [], []>} : vector<32x128xf32>, vector<128x128xf32>, vector<32x128xf32> -> vector<32x128xf32>
    %23 = arith.addf %17, %22 : vector<32x128xf32>
    %c0_23 = arith.constant 0 : index
    %c0_24 = arith.constant 0 : index
    %24 = vector.load %arg4[%c0_23, %c0_24] : memref<1x128xf32, #tpu.memory_space<vmem>>, vector<1x128xf32>
    %25 = vector.broadcast %24 : vector<1x128xf32> to vector<32x128xf32>
    %26 = arith.mulf %23, %25 : vector<32x128xf32>
    %c0_25 = arith.constant 0 : index
    %c0_26 = arith.constant 0 : index
    %27 = vector.load %arg5[%c0_25, %c0_26] : memref<1x128xf32, #tpu.memory_space<vmem>>, vector<1x128xf32>
    %28 = vector.broadcast %27 : vector<1x128xf32> to vector<32x128xf32>
    %29 = arith.addf %26, %28 : vector<32x128xf32>
    %cst_27 = arith.constant 0.000000e+00 : f32
    %30 = vector.broadcast %cst_27 : f32 to vector<32x128xf32>
    %31 = arith.maximumf %29, %30 : vector<32x128xf32>
    %32 = vector.shape_cast %31 : vector<32x128xf32> to vector<2x16x128xf32>
    %c0_28 = arith.constant 0 : index
    %c1_29 = arith.constant 1 : index
    %c0_30 = arith.constant 0 : index
    %33 = vector.load %arg9[%c0_28, %c1_29, %c0_30] : memref<2x18x128xf32, #tpu.memory_space<vmem>>, vector<2x16x128xf32>
    tpu.vector_store %arg9[%c0_28, %c1_29, %c0_30], %32 {strides = array<i32>} : memref<2x18x128xf32, #tpu.memory_space<vmem>>, vector<2x16x128xf32>,
    %c0_31 = arith.constant 0 : index
    %c0_32 = arith.constant 0 : index
    %c0_33 = arith.constant 0 : index
    %34 = vector.load %arg9[%c0_31, %c0_32, %c0_33] : memref<2x18x128xf32, #tpu.memory_space<vmem>>, vector<2x18x128xf32>
    %35 = vector.extract_strided_slice %34 {offsets = [0, 0, 0], sizes = [2, 16, 128], strides = [1, 1, 1]} : vector<2x18x128xf32> to vector<2x16x128xf32>
    %36 = vector.shape_cast %35 : vector<2x16x128xf32> to vector<32x128xf32>
    %c0_34 = arith.constant 0 : index
    %c0_35 = arith.constant 0 : index
    %c0_36 = arith.constant 0 : index
    %37 = vector.load %arg3[%c0_34, %c0_35, %c0_36] : memref<3x128x128xf32, #tpu.memory_space<vmem>>, vector<1x128x128xf32>
    %38 = vector.shape_cast %37 : vector<1x128x128xf32> to vector<128x128xf32>
    %cst_37 = arith.constant dense<0.000000e+00> : vector<32x128xf32>
    %39 = tpu.matmul %36, %38, %cst_37 {dimension_numbers = #tpu.dot_dimension_numbers<[1], [0], [0], [1], [0, 0, 1, 1], [], []>} : vector<32x128xf32>, vector<128x128xf32>, vector<32x128xf32> -> vector<32x128xf32>
    %40 = vector.extract_strided_slice %34 {offsets = [0, 1, 0], sizes = [2, 16, 128], strides = [1, 1, 1]} : vector<2x18x128xf32> to vector<2x16x128xf32>
    %41 = vector.shape_cast %40 : vector<2x16x128xf32> to vector<32x128xf32>
    %c1_38 = arith.constant 1 : index
    %c0_39 = arith.constant 0 : index
    %c0_40 = arith.constant 0 : index
    %42 = vector.load %arg3[%c1_38, %c0_39, %c0_40] : memref<3x128x128xf32, #tpu.memory_space<vmem>>, vector<1x128x128xf32>
    %43 = vector.shape_cast %42 : vector<1x128x128xf32> to vector<128x128xf32>
    %cst_41 = arith.constant dense<0.000000e+00> : vector<32x128xf32>
    %44 = tpu.matmul %41, %43, %cst_41 {dimension_numbers = #tpu.dot_dimension_numbers<[1], [0], [0], [1], [0, 0, 1, 1], [], []>} : vector<32x128xf32>, vector<128x128xf32>, vector<32x128xf32> -> vector<32x128xf32>
    %45 = arith.addf %39, %44 : vector<32x128xf32>
    %46 = vector.extract_strided_slice %34 {offsets = [0, 2, 0], sizes = [2, 16, 128], strides = [1, 1, 1]} : vector<2x18x128xf32> to vector<2x16x128xf32>
    %47 = vector.shape_cast %46 : vector<2x16x128xf32> to vector<32x128xf32>
    %c2_42 = arith.constant 2 : index
    %c0_43 = arith.constant 0 : index
    %c0_44 = arith.constant 0 : index
    %48 = vector.load %arg3[%c2_42, %c0_43, %c0_44] : memref<3x128x128xf32, #tpu.memory_space<vmem>>, vector<1x128x128xf32>
    %49 = vector.shape_cast %48 : vector<1x128x128xf32> to vector<128x128xf32>
    %cst_45 = arith.constant dense<0.000000e+00> : vector<32x128xf32>
    %50 = tpu.matmul %47, %49, %cst_45 {dimension_numbers = #tpu.dot_dimension_numbers<[1], [0], [0], [1], [0, 0, 1, 1], [], []>} : vector<32x128xf32>, vector<128x128xf32>, vector<32x128xf32> -> vector<32x128xf32>
    %51 = arith.addf %45, %50 : vector<32x128xf32>
    %c0_46 = arith.constant 0 : index
    %c0_47 = arith.constant 0 : index
    %52 = vector.load %arg6[%c0_46, %c0_47] : memref<1x128xf32, #tpu.memory_space<vmem>>, vector<1x128xf32>
    %53 = vector.broadcast %52 : vector<1x128xf32> to vector<32x128xf32>
    %54 = arith.mulf %51, %53 : vector<32x128xf32>
    %c0_48 = arith.constant 0 : index
    %c0_49 = arith.constant 0 : index
    %55 = vector.load %arg7[%c0_48, %c0_49] : memref<1x128xf32, #tpu.memory_space<vmem>>, vector<1x128xf32>
    %56 = vector.broadcast %55 : vector<1x128xf32> to vector<32x128xf32>
    %57 = arith.addf %54, %56 : vector<32x128xf32>
    %58 = arith.addf %57, %4 : vector<32x128xf32>
    %cst_50 = arith.constant 0.000000e+00 : f32
    %59 = vector.broadcast %cst_50 : f32 to vector<32x128xf32>
    %60 = arith.maximumf %58, %59 : vector<32x128xf32>
    %61 = vector.shape_cast %60 : vector<32x128xf32> to vector<2x16x128xf32>
    %c0_51 = arith.constant 0 : index
    %c0_52 = arith.constant 0 : index
    %c0_53 = arith.constant 0 : index
    %62 = vector.load %arg8[%c0_51, %c0_52, %c0_53] : memref<2x16x128xf32, #tpu.memory_space<vmem>>, vector<2x16x128xf32>
    tpu.vector_store %arg8[%c0_51, %c0_52, %c0_53], %61 {strides = array<i32>} : memref<2x16x128xf32, #tpu.memory_space<vmem>>, vector<2x16x128xf32>,
    return
  }
  func.func @transform_0(%arg0: i32) -> (i32, i32, i32) {
    %c0_i32 = arith.constant 0 : i32
    %c0_i32_0 = arith.constant 0 : i32
    %c0_i32_1 = arith.constant 0 : i32
    return %arg0, %c0_i32, %c0_i32_0 : i32, i32, i32
  }
  func.func @transform_1(%arg0: i32) -> (i32, i32, i32) {
    %c0_i32 = arith.constant 0 : i32
    %c0_i32_0 = arith.constant 0 : i32
    %c0_i32_1 = arith.constant 0 : i32
    %c0_i32_2 = arith.constant 0 : i32
    return %c0_i32, %c0_i32_0, %c0_i32_1 : i32, i32, i32
  }
  func.func @transform_2(%arg0: i32) -> (i32, i32, i32) {
    %c0_i32 = arith.constant 0 : i32
    %c0_i32_0 = arith.constant 0 : i32
    %c0_i32_1 = arith.constant 0 : i32
    %c0_i32_2 = arith.constant 0 : i32
    return %c0_i32, %c0_i32_0, %c0_i32_1 : i32, i32, i32
  }
  func.func @transform_3(%arg0: i32) -> (i32, i32) {
    %c0_i32 = arith.constant 0 : i32
    %c0_i32_0 = arith.constant 0 : i32
    %c0_i32_1 = arith.constant 0 : i32
    return %c0_i32, %c0_i32_0 : i32, i32
  }
  func.func @transform_4(%arg0: i32) -> (i32, i32) {
    %c0_i32 = arith.constant 0 : i32
    %c0_i32_0 = arith.constant 0 : i32
    %c0_i32_1 = arith.constant 0 : i32
    return %c0_i32, %c0_i32_0 : i32, i32
  }
  func.func @transform_5(%arg0: i32) -> (i32, i32) {
    %c0_i32 = arith.constant 0 : i32
    %c0_i32_0 = arith.constant 0 : i32
    %c0_i32_1 = arith.constant 0 : i32
    return %c0_i32, %c0_i32_0 : i32, i32
  }
  func.func @transform_6(%arg0: i32) -> (i32, i32) {
    %c0_i32 = arith.constant 0 : i32
    %c0_i32_0 = arith.constant 0 : i32
    %c0_i32_1 = arith.constant 0 : i32
    return %c0_i32, %c0_i32_0 : i32, i32
  }
  func.func @transform_7(%arg0: i32) -> (i32, i32, i32) {
    %c0_i32 = arith.constant 0 : i32
    %c0_i32_0 = arith.constant 0 : i32
    %c0_i32_1 = arith.constant 0 : i32
    return %arg0, %c0_i32, %c0_i32_0 : i32, i32, i32
  }
}

</mosaic_0001>

<llo_original>
// kernel: residual_block.1
$region0: #{residual_block.1}
  #allocation0 [shape = 'u32[]', space=smem, size = 0x4, offset = 0x4, fixed_abs, tag = 'smem constant byte address 0x4 - core index']
  #allocation1 [shape = 'u32[144,128]{1,0:T(1,128)}', space=vmem, size = 0x12000, scoped, tag = 'internal scratch']
  #allocation2 [shape = 'f32[2,18,128]{2,1,0:T(8,128)}', space=vmem, size = 0x6000, scoped, tag = 'scratch operand']
  %s0 = inlined_call_operand.vmem [shape: f32[2,16,128], index: 0, kind: input, shape index: {}]
  %s1 = inlined_call_operand.vmem [shape: f32[3,128,128], index: 1, kind: input, shape index: {}]
  %s2 = inlined_call_operand.vmem [shape: f32[3,128,128], index: 2, kind: input, shape index: {}]
  %s3 = inlined_call_operand.vmem [shape: f32[1,128], index: 3, kind: input, shape index: {}]
  %s4 = inlined_call_operand.vmem [shape: f32[1,128], index: 4, kind: input, shape index: {}]
  %s5 = inlined_call_operand.vmem [shape: f32[1,128], index: 5, kind: input, shape index: {}]
  %s6 = inlined_call_operand.vmem [shape: f32[1,128], index: 6, kind: input, shape index: {}]
  %s7 = inlined_call_operand.vmem [shape: f32[2,16,128], index: 7, kind: output, shape index: {}]
  %s8 = sld [smem:[#allocation0]]
  $region38: #{residual_block.1} parent=0
    _
  %s10 = ssub.s32 1, %s8
  %s11 = scalar_select 0, %s10, %s8
  // Predicated region
  $region2: #{residual_block.1} parent=0 // pred_check
    _
  $region3: #{residual_block.1} parent=0 // pred_check_branch
    %13 = sbr.rel (0) target = $region5
  $region4: #{residual_block.1} parent=0 // pred_region
    _
  $region5: #{residual_block.1} parent=0 // pred_fallthru
    _
  // Predicated region
  $region6: #{residual_block.1} parent=0 // pred_check
    _
  $region7: #{residual_block.1} parent=0 // pred_check_branch
    %15 = sbr.rel (0) target = $region9
  $region8: #{residual_block.1} parent=0 // pred_region
    _
  $region9: #{residual_block.1} parent=0 // pred_fallthru
    _
  // Predicated region
  $region10: #{residual_block.1} parent=0 // pred_check
    _
  $region11: #{residual_block.1} parent=0 // pred_check_branch
    %17 = sbr.rel (0) target = $region13
  $region12: #{residual_block.1} parent=0 // pred_region
    _
  $region13: #{residual_block.1} parent=0 // pred_fallthru
    _
  // Predicated region
  $region14: #{residual_block.1} parent=0 // pred_check
    _
  $region15: #{residual_block.1} parent=0 // pred_check_branch
    %19 = sbr.rel (0) target = $region17
  $region16: #{residual_block.1} parent=0 // pred_region
    _
  $region17: #{residual_block.1} parent=0 // pred_fallthru
    _
  // Predicated region
  $region18: #{residual_block.1} parent=0 // pred_check
    _
  $region19: #{residual_block.1} parent=0 // pred_check_branch
    %21 = sbr.rel (0) target = $region21
  $region20: #{residual_block.1} parent=0 // pred_region
    _
  $region21: #{residual_block.1} parent=0 // pred_fallthru
    _
  // Predicated region
  $region22: #{residual_block.1} parent=0 // pred_check
    _
  $region23: #{residual_block.1} parent=0 // pred_check_branch
    %23 = sbr.rel (0) target = $region25
  $region24: #{residual_block.1} parent=0 // pred_region
    _
  $region25: #{residual_block.1} parent=0 // pred_fallthru
    _
  // Predicated region
  $region26: #{residual_block.1} parent=0 // pred_check
    _
  $region27: #{residual_block.1} parent=0 // pred_check_branch
    %25 = sbr.rel (0) target = $region29
  $region28: #{residual_block.1} parent=0 // pred_region
    _
  $region29: #{residual_block.1} parent=0 // pred_fallthru
    _
  %26 = vst [vmem:[#allocation2] sm:$0x1] 0.0
  %27 = vst [vmem:[#allocation2 + $0x18] sm:$0x1] 0.0
  %28 = vst [vmem:[#allocation2 + $0x11] sm:$0x1] 0.0
  %29 = vst [vmem:[#allocation2 + $0x29] sm:$0x1] 0.0
  %v30 = vld [vmem:[%s0] sm:$0xff]
  %v31 = vld [vmem:[%s0 + $0x8] sm:$0xff]
  %v32 = vld [vmem:[%s0 + $0x10] sm:$0xff]
  %v33 = vld [vmem:[%s0 + $0x18] sm:$0xff]
  %34 = vst [vmem:[#allocation2 + $0x1] sm:$0xff] %v30
  %35 = vst [vmem:[#allocation2 + $0x9] sm:$0xff] %v31
  %36 = vst [vmem:[#allocation2 + $0x19] sm:$0xff] %v32
  %37 = vst [vmem:[#allocation2 + $0x21] sm:$0xff] %v33
  %v38 = vld [vmem:[#allocation2] sm:$0xff]
  %v39 = vld [vmem:[#allocation2 + $0x8] sm:$0xff]
  %v40 = vld [vmem:[#allocation2 + $0x10] sm:$0x3]
  %v41 = vld [vmem:[#allocation2 + $0x18] sm:$0xff]
  %v42 = vld [vmem:[#allocation2 + $0x20] sm:$0xff]
  %v43 = vld [vmem:[#allocation2 + $0x28] sm:$0x3]
  %v44 = vld [vmem:[%s1] sm:$0xff]
  %v45 = vld [vmem:[%s1 + $0x8] sm:$0xff]
  %v46 = vld [vmem:[%s1 + $0x10] sm:$0xff]
  %v47 = vld [vmem:[%s1 + $0x18] sm:$0xff]
  %v48 = vld [vmem:[%s1 + $0x20] sm:$0xff]
  %v49 = vld [vmem:[%s1 + $0x28] sm:$0xff]
  %v50 = vld [vmem:[%s1 + $0x30] sm:$0xff]
  %v51 = vld [vmem:[%s1 + $0x38] sm:$0xff]
  %v52 = vld [vmem:[%s1 + $0x40] sm:$0xff]
  %v53 = vld [vmem:[%s1 + $0x48] sm:$0xff]
  %v54 = vld [vmem:[%s1 + $0x50] sm:$0xff]
  %v55 = vld [vmem:[%s1 + $0x58] sm:$0xff]
  %v56 = vld [vmem:[%s1 + $0x60] sm:$0xff]
  %v57 = vld [vmem:[%s1 + $0x68] sm:$0xff]
  %v58 = vld [vmem:[%s1 + $0x70] sm:$0xff]
  %v59 = vld [vmem:[%s1 + $0x78] sm:$0xff]
  %vm66 = vcmask 1046528
  %v67 = vrot.slane %v38, 1
  %v68 = vrot.slane %v39, 1
  %v69 = vsel %vm66, %v67, %v68
  %v70 = vrot.slane %v40, 1
  %v71 = vsel %vm66, %v68, %v70
  %v72 = vrot.slane %v41, 1
  %v73 = vrot.slane %v42, 1
  %v74 = vsel %vm66, %v72, %v73
  %v75 = vrot.slane %v43, 1
  %v76 = vsel %vm66, %v73, %v75
  %s81 = scalar_lea.vmem %s1, 128
  %v82 = vld [vmem:[%s81] sm:$0xff]
  %v83 = vld [vmem:[%s81 + $0x8] sm:$0xff]
  %v84 = vld [vmem:[%s81 + $0x10] sm:$0xff]
  %v85 = vld [vmem:[%s81 + $0x18] sm:$0xff]
  %v86 = vld [vmem:[%s81 + $0x20] sm:$0xff]
  %v87 = vld [vmem:[%s81 + $0x28] sm:$0xff]
  %v88 = vld [vmem:[%s81 + $0x30] sm:$0xff]
  %v89 = vld [vmem:[%s81 + $0x38] sm:$0xff]
  %v90 = vld [vmem:[%s81 + $0x40] sm:$0xff]
  %v91 = vld [vmem:[%s81 + $0x48] sm:$0xff]
  %v92 = vld [vmem:[%s81 + $0x50] sm:$0xff]
  %v93 = vld [vmem:[%s81 + $0x58] sm:$0xff]
  %v94 = vld [vmem:[%s81 + $0x60] sm:$0xff]
  %v95 = vld [vmem:[%s81 + $0x68] sm:$0xff]
  %v96 = vld [vmem:[%s81 + $0x70] sm:$0xff]
  %v97 = vld [vmem:[%s81 + $0x78] sm:$0xff]
  %98 = vmatprep.subr.mxu0 0.0
  %99 = vmatpush1.msra.mxu0 %v97
  %100 = vmatprep.subr.mxu0 0.0
  %101 = vmatpush1.msra.mxu0 %v96
  %102 = vmatprep.subr.mxu0 0.0
  %103 = vmatpush1.msra.mxu0 %v95
  %104 = vmatprep.subr.mxu0 0.0
  %105 = vmatpush1.msra.mxu0 %v94
  %106 = vmatprep.subr.mxu0 0.0
  %107 = vmatpush1.msra.mxu0 %v93
  %108 = vmatprep.subr.mxu0 0.0
  %109 = vmatpush1.msra.mxu0 %v92
  %110 = vmatprep.subr.mxu0 0.0
  %111 = vmatpush1.msra.mxu0 %v91
  %112 = vmatprep.subr.mxu0 0.0
  %113 = vmatpush1.msra.mxu0 %v90
  %114 = vmatprep.subr.mxu0 0.0
  %115 = vmatpush1.msra.mxu0 %v89
  %116 = vmatprep.subr.mxu0 0.0
  %117 = vmatpush1.msra.mxu0 %v88
  %118 = vmatprep.subr.mxu0 0.0
  %119 = vmatpush1.msra.mxu0 %v87
  %120 = vmatprep.subr.mxu0 0.0
  %121 = vmatpush1.msra.mxu0 %v86
  %122 = vmatprep.subr.mxu0 0.0
  %123 = vmatpush1.msra.mxu0 %v85
  %124 = vmatprep.subr.mxu0 0.0
  %125 = vmatpush1.msra.mxu0 %v84
  %126 = vmatprep.subr.mxu0 0.0
  %127 = vmatpush1.msra.mxu0 %v83
  %128 = vmatprep.subr.mxu0 0.0
  %129 = vmatpush1.msra.mxu0 %v82
  %130 = vmatprep.subr.mxu0 0.0
  %131 = vmatpush2.msra.mxu0 0.0
  %132 = vmatprep.subr.mxu0 0.0
  %133 = vmatpush2.msra.mxu0 0.0
  %134 = vmatprep.subr.mxu0 0.0
  %135 = vmatpush2.msra.mxu0 0.0
  %136 = vmatprep.subr.mxu0 0.0
  %137 = vmatpush2.msra.mxu0 0.0
  %138 = vmatprep.subr.mxu0 0.0
  %139 = vmatpush2.msra.mxu0 0.0
  %140 = vmatprep.subr.mxu0 0.0
  %141 = vmatpush2.msra.mxu0 0.0
  %142 = vmatprep.subr.mxu0 0.0
  %143 = vmatpush2.msra.mxu0 0.0
  %144 = vmatprep.subr.mxu0 0.0
  %145 = vmatpush2.msra.mxu0 0.0
  %146 = vmatprep.subr.mxu0 0.0
  %147 = vmatpush2.msra.mxu0 0.0
  %148 = vmatprep.subr.mxu0 0.0
  %149 = vmatpush2.msra.mxu0 0.0
  %150 = vmatprep.subr.mxu0 0.0
  %151 = vmatpush2.msra.mxu0 0.0
  %152 = vmatprep.subr.mxu0 0.0
  %153 = vmatpush2.msra.mxu0 0.0
  %154 = vmatprep.subr.mxu0 0.0
  %155 = vmatpush2.msra.mxu0 0.0
  %156 = vmatprep.subr.mxu0 0.0
  %157 = vmatpush2.msra.mxu0 0.0
  %158 = vmatprep.subr.mxu0 0.0
  %159 = vmatpush2.msra.mxu0 0.0
  %160 = vmatprep.subr.mxu0 0.0
  %161 = vmatpush2.msra.mxu0 0.0
  %162 = vmatprep.mubr.f32.mxu0 0.0
  %163 = vmatmul.mubr.f32.gmra.mxu0 %v69
  %v164 = vpop.f32.mrf.mxu0
  %v165 = vadd.f32 0.0, %v164
  %v166 = vpop.f32.mrf.mxu0
  %167 = vmatprep.mubr.f32.mxu0 0.0
  %168 = vmatmul.mubr.f32.gmra.mxu0 %v71
  %v169 = vpop.f32.mrf.mxu0
  %v170 = vadd.f32 0.0, %v169
  %v171 = vpop.f32.mrf.mxu0
  %172 = vmatprep.mubr.f32.mxu0 0.0
  %173 = vmatmul.mubr.f32.gmra.mxu0 %v74
  %v174 = vpop.f32.mrf.mxu0
  %v175 = vadd.f32 0.0, %v174
  %v176 = vpop.f32.mrf.mxu0
  %177 = vmatprep.mubr.f32.mxu0 0.0
  %178 = vmatmul.mubr.f32.gmra.mxu0 %v76
  %v179 = vpop.f32.mrf.mxu0
  %v180 = vadd.f32 0.0, %v179
  %v181 = vpop.f32.mrf.mxu0
  %182 = vdwg.mxu0
  %183 = vmatprep.subr.mxu0 0.0
  %184 = vmatpush1.msra.mxu0 %v59
  %185 = vmatprep.subr.mxu0 0.0
  %186 = vmatpush1.msra.mxu0 %v58
  %187 = vmatprep.subr.mxu0 0.0
  %188 = vmatpush1.msra.mxu0 %v57
  %189 = vmatprep.subr.mxu0 0.0
  %190 = vmatpush1.msra.mxu0 %v56
  %191 = vmatprep.subr.mxu0 0.0
  %192 = vmatpush1.msra.mxu0 %v55
  %193 = vmatprep.subr.mxu0 0.0
  %194 = vmatpush1.msra.mxu0 %v54
  %195 = vmatprep.subr.mxu0 0.0
  %196 = vmatpush1.msra.mxu0 %v53
  %197 = vmatprep.subr.mxu0 0.0
  %198 = vmatpush1.msra.mxu0 %v52
  %199 = vmatprep.subr.mxu0 0.0
  %200 = vmatpush1.msra.mxu0 %v51
  %201 = vmatprep.subr.mxu0 0.0
  %202 = vmatpush1.msra.mxu0 %v50
  %203 = vmatprep.subr.mxu0 0.0
  %204 = vmatpush1.msra.mxu0 %v49
  %205 = vmatprep.subr.mxu0 0.0
  %206 = vmatpush1.msra.mxu0 %v48
  %207 = vmatprep.subr.mxu0 0.0
  %208 = vmatpush1.msra.mxu0 %v47
  %209 = vmatprep.subr.mxu0 0.0
  %210 = vmatpush1.msra.mxu0 %v46
  %211 = vmatprep.subr.mxu0 0.0
  %212 = vmatpush1.msra.mxu0 %v45
  %213 = vmatprep.subr.mxu0 0.0
  %214 = vmatpush1.msra.mxu0 %v44
  %215 = vmatprep.subr.mxu0 0.0
  %216 = vmatpush2.msra.mxu0 0.0
  %217 = vmatprep.subr.mxu0 0.0
  %218 = vmatpush2.msra.mxu0 0.0
  %219 = vmatprep.subr.mxu0 0.0
  %220 = vmatpush2.msra.mxu0 0.0
  %221 = vmatprep.subr.mxu0 0.0
  %222 = vmatpush2.msra.mxu0 0.0
  %223 = vmatprep.subr.mxu0 0.0
  %224 = vmatpush2.msra.mxu0 0.0
  %225 = vmatprep.subr.mxu0 0.0
  %226 = vmatpush2.msra.mxu0 0.0
  %227 = vmatprep.subr.mxu0 0.0
  %228 = vmatpush2.msra.mxu0 0.0
  %229 = vmatprep.subr.mxu0 0.0
  %230 = vmatpush2.msra.mxu0 0.0
  %231 = vmatprep.subr.mxu0 0.0
  %232 = vmatpush2.msra.mxu0 0.0
  %233 = vmatprep.subr.mxu0 0.0
  %234 = vmatpush2.msra.mxu0 0.0
  %235 = vmatprep.subr.mxu0 0.0
  %236 = vmatpush2.msra.mxu0 0.0
  %237 = vmatprep.subr.mxu0 0.0
  %238 = vmatpush2.msra.mxu0 0.0
  %239 = vmatprep.subr.mxu0 0.0
  %240 = vmatpush2.msra.mxu0 0.0
  %241 = vmatprep.subr.mxu0 0.0
  %242 = vmatpush2.msra.mxu0 0.0
  %243 = vmatprep.subr.mxu0 0.0
  %244 = vmatpush2.msra.mxu0 0.0
  %245 = vmatprep.subr.mxu0 0.0
  %246 = vmatpush2.msra.mxu0 0.0
  %247 = vmatprep.mubr.f32.mxu0 0.0
  %248 = vmatmul.mubr.f32.gmra.mxu0 %v38
  %v249 = vpop.f32.mrf.mxu0
  %v250 = vadd.f32 %v165, %v249
  %v251 = vpop.f32.mrf.mxu0
  %252 = vmatprep.mubr.f32.mxu0 0.0
  %253 = vmatmul.mubr.f32.gmra.mxu0 %v39
  %v254 = vpop.f32.mrf.mxu0
  %v255 = vadd.f32 %v170, %v254
  %v256 = vpop.f32.mrf.mxu0
  %257 = vmatprep.mubr.f32.mxu0 0.0
  %258 = vmatmul.mubr.f32.gmra.mxu0 %v41
  %v259 = vpop.f32.mrf.mxu0
  %v260 = vadd.f32 %v175, %v259
  %v261 = vpop.f32.mrf.mxu0
  %262 = vmatprep.mubr.f32.mxu0 0.0
  %263 = vmatmul.mubr.f32.gmra.mxu0 %v42
  %v264 = vpop.f32.mrf.mxu0
  %v265 = vadd.f32 %v180, %v264
  %v266 = vpop.f32.mrf.mxu0
  %267 = vdwg.mxu0
  %vm268 = vcmask 1045504
  %v269 = vrot.slane %v38, 2
  %v270 = vrot.slane %v39, 2
  %v271 = vsel %vm268, %v269, %v270
  %v272 = vrot.slane %v40, 2
  %v273 = vsel %vm268, %v270, %v272
  %v274 = vrot.slane %v41, 2
  %v275 = vrot.slane %v42, 2
  %v276 = vsel %vm268, %v274, %v275
  %v277 = vrot.slane %v43, 2
  %v278 = vsel %vm268, %v275, %v277
  %s283 = scalar_lea.vmem %s1, 256
  %v284 = vld [vmem:[%s283] sm:$0xff]
  %v285 = vld [vmem:[%s283 + $0x8] sm:$0xff]
  %v286 = vld [vmem:[%s283 + $0x10] sm:$0xff]
  %v287 = vld [vmem:[%s283 + $0x18] sm:$0xff]
  %v288 = vld [vmem:[%s283 + $0x20] sm:$0xff]
  %v289 = vld [vmem:[%s283 + $0x28] sm:$0xff]
  %v290 = vld [vmem:[%s283 + $0x30] sm:$0xff]
  %v291 = vld [vmem:[%s283 + $0x38] sm:$0xff]
  %v292 = vld [vmem:[%s283 + $0x40] sm:$0xff]
  %v293 = vld [vmem:[%s283 + $0x48] sm:$0xff]
  %v294 = vld [vmem:[%s283 + $0x50] sm:$0xff]
  %v295 = vld [vmem:[%s283 + $0x58] sm:$0xff]
  %v296 = vld [vmem:[%s283 + $0x60] sm:$0xff]
  %v297 = vld [vmem:[%s283 + $0x68] sm:$0xff]
  %v298 = vld [vmem:[%s283 + $0x70] sm:$0xff]
  %v299 = vld [vmem:[%s283 + $0x78] sm:$0xff]
  %300 = vmatprep.subr.mxu0 0.0
  %301 = vmatpush1.msra.mxu0 %v299
  %302 = vmatprep.subr.mxu0 0.0
  %303 = vmatpush1.msra.mxu0 %v298
  %304 = vmatprep.subr.mxu0 0.0
  %305 = vmatpush1.msra.mxu0 %v297
  %306 = vmatprep.subr.mxu0 0.0
  %307 = vmatpush1.msra.mxu0 %v296
  %308 = vmatprep.subr.mxu0 0.0
  %309 = vmatpush1.msra.mxu0 %v295
  %310 = vmatprep.subr.mxu0 0.0
  %311 = vmatpush1.msra.mxu0 %v294
  %312 = vmatprep.subr.mxu0 0.0
  %313 = vmatpush1.msra.mxu0 %v293
  %314 = vmatprep.subr.mxu0 0.0
  %315 = vmatpush1.msra.mxu0 %v292
  %316 = vmatprep.subr.mxu0 0.0
  %317 = vmatpush1.msra.mxu0 %v291
  %318 = vmatprep.subr.mxu0 0.0
  %319 = vmatpush1.msra.mxu0 %v290
  %320 = vmatprep.subr.mxu0 0.0
  %321 = vmatpush1.msra.mxu0 %v289
  %322 = vmatprep.subr.mxu0 0.0
  %323 = vmatpush1.msra.mxu0 %v288
  %324 = vmatprep.subr.mxu0 0.0
  %325 = vmatpush1.msra.mxu0 %v287
  %326 = vmatprep.subr.mxu0 0.0
  %327 = vmatpush1.msra.mxu0 %v286
  %328 = vmatprep.subr.mxu0 0.0
  %329 = vmatpush1.msra.mxu0 %v285
  %330 = vmatprep.subr.mxu0 0.0
  %331 = vmatpush1.msra.mxu0 %v284
  %332 = vmatprep.subr.mxu0 0.0
  %333 = vmatpush2.msra.mxu0 0.0
  %334 = vmatprep.subr.mxu0 0.0
  %335 = vmatpush2.msra.mxu0 0.0
  %336 = vmatprep.subr.mxu0 0.0
  %337 = vmatpush2.msra.mxu0 0.0
  %338 = vmatprep.subr.mxu0 0.0
  %339 = vmatpush2.msra.mxu0 0.0
  %340 = vmatprep.subr.mxu0 0.0
  %341 = vmatpush2.msra.mxu0 0.0
  %342 = vmatprep.subr.mxu0 0.0
  %343 = vmatpush2.msra.mxu0 0.0
  %344 = vmatprep.subr.mxu0 0.0
  %345 = vmatpush2.msra.mxu0 0.0
  %346 = vmatprep.subr.mxu0 0.0
  %347 = vmatpush2.msra.mxu0 0.0
  %348 = vmatprep.subr.mxu0 0.0
  %349 = vmatpush2.msra.mxu0 0.0
  %350 = vmatprep.subr.mxu0 0.0
  %351 = vmatpush2.msra.mxu0 0.0
  %352 = vmatprep.subr.mxu0 0.0
  %353 = vmatpush2.msra.mxu0 0.0
  %354 = vmatprep.subr.mxu0 0.0
  %355 = vmatpush2.msra.mxu0 0.0
  %356 = vmatprep.subr.mxu0 0.0
  %357 = vmatpush2.msra.mxu0 0.0
  %358 = vmatprep.subr.mxu0 0.0
  %359 = vmatpush2.msra.mxu0 0.0
  %360 = vmatprep.subr.mxu0 0.0
  %361 = vmatpush2.msra.mxu0 0.0
  %362 = vmatprep.subr.mxu0 0.0
  %363 = vmatpush2.msra.mxu0 0.0
  %364 = vmatprep.mubr.f32.mxu0 0.0
  %365 = vmatmul.mubr.f32.gmra.mxu0 %v271
  %v366 = vpop.f32.mrf.mxu0
  %v367 = vadd.f32 0.0, %v366
  %v368 = vpop.f32.mrf.mxu0
  %369 = vmatprep.mubr.f32.mxu0 0.0
  %370 = vmatmul.mubr.f32.gmra.mxu0 %v273
  %v371 = vpop.f32.mrf.mxu0
  %v372 = vadd.f32 0.0, %v371
  %v373 = vpop.f32.mrf.mxu0
  %374 = vmatprep.mubr.f32.mxu0 0.0
  %375 = vmatmul.mubr.f32.gmra.mxu0 %v276
  %v376 = vpop.f32.mrf.mxu0
  %v377 = vadd.f32 0.0, %v376
  %v378 = vpop.f32.mrf.mxu0
  %379 = vmatprep.mubr.f32.mxu0 0.0
  %380 = vmatmul.mubr.f32.gmra.mxu0 %v278
  %v381 = vpop.f32.mrf.mxu0
  %v382 = vadd.f32 0.0, %v381
  %v383 = vpop.f32.mrf.mxu0
  %384 = vdwg.mxu0
  %v385 = vadd.f32 %v250, %v367
  %v386 = vadd.f32 %v255, %v372
  %v387 = vadd.f32 %v260, %v377
  %v388 = vadd.f32 %v265, %v382
  %v389 = vld [vmem:[%s3] sm:$0x1]
  %v391 = vlaneseq
  %v392 = vshrl.u32 %v391, 7
  %v393 = vsub.s32 0, %v392
  %v394 = vrot.slane %v389, %v393
  %v396 = vmul.f32 %v385, %v394
  %v397 = vmul.f32 %v386, %v394
  %v398 = vmul.f32 %v387, %v394
  %v399 = vmul.f32 %v388, %v394
  %v400 = vld [vmem:[%s4] sm:$0x1]
  %v402 = vlaneseq
  %v403 = vshrl.u32 %v402, 7
  %v404 = vsub.s32 0, %v403
  %v405 = vrot.slane %v400, %v404
  %v407 = vadd.f32 %v396, %v405
  %v408 = vadd.f32 %v397, %v405
  %v409 = vadd.f32 %v398, %v405
  %v410 = vadd.f32 %v399, %v405
  %v411 = vmax.f32 %v407, 0.0
  %v412 = vmax.f32 %v408, 0.0
  %v413 = vmax.f32 %v409, 0.0
  %v414 = vmax.f32 %v410, 0.0
  %415 = vst [vmem:[#allocation2 + $0x1] sm:$0xff] %v411
  %416 = vst [vmem:[#allocation2 + $0x9] sm:$0xff] %v412
  %417 = vst [vmem:[#allocation2 + $0x19] sm:$0xff] %v413
  %418 = vst [vmem:[#allocation2 + $0x21] sm:$0xff] %v414
  %v419 = vld [vmem:[#allocation2] sm:$0xff]
  %v420 = vld [vmem:[#allocation2 + $0x8] sm:$0xff]
  %v421 = vld [vmem:[#allocation2 + $0x10] sm:$0x3]
  %v422 = vld [vmem:[#allocation2 + $0x18] sm:$0xff]
  %v423 = vld [vmem:[#allocation2 + $0x20] sm:$0xff]
  %v424 = vld [vmem:[#allocation2 + $0x28] sm:$0x3]
  %v425 = vld [vmem:[%s2] sm:$0xff]
  %v426 = vld [vmem:[%s2 + $0x8] sm:$0xff]
  %v427 = vld [vmem:[%s2 + $0x10] sm:$0xff]
  %v428 = vld [vmem:[%s2 + $0x18] sm:$0xff]
  %v429 = vld [vmem:[%s2 + $0x20] sm:$0xff]
  %v430 = vld [vmem:[%s2 + $0x28] sm:$0xff]
  %v431 = vld [vmem:[%s2 + $0x30] sm:$0xff]
  %v432 = vld [vmem:[%s2 + $0x38] sm:$0xff]
  %v433 = vld [vmem:[%s2 + $0x40] sm:$0xff]
  %v434 = vld [vmem:[%s2 + $0x48] sm:$0xff]
  %v435 = vld [vmem:[%s2 + $0x50] sm:$0xff]
  %v436 = vld [vmem:[%s2 + $0x58] sm:$0xff]
  %v437 = vld [vmem:[%s2 + $0x60] sm:$0xff]
  %v438 = vld [vmem:[%s2 + $0x68] sm:$0xff]
  %v439 = vld [vmem:[%s2 + $0x70] sm:$0xff]
  %v440 = vld [vmem:[%s2 + $0x78] sm:$0xff]
  %v447 = vrot.slane %v419, 1
  %v448 = vrot.slane %v420, 1
  %v449 = vsel %vm66, %v447, %v448
  %v450 = vrot.slane %v421, 1
  %v451 = vsel %vm66, %v448, %v450
  %v452 = vrot.slane %v422, 1
  %v453 = vrot.slane %v423, 1
  %v454 = vsel %vm66, %v452, %v453
  %v455 = vrot.slane %v424, 1
  %v456 = vsel %vm66, %v453, %v455
  %s461 = scalar_lea.vmem %s2, 128
  %v462 = vld [vmem:[%s461] sm:$0xff]
  %v463 = vld [vmem:[%s461 + $0x8] sm:$0xff]
  %v464 = vld [vmem:[%s461 + $0x10] sm:$0xff]
  %v465 = vld [vmem:[%s461 + $0x18] sm:$0xff]
  %v466 = vld [vmem:[%s461 + $0x20] sm:$0xff]
  %v467 = vld [vmem:[%s461 + $0x28] sm:$0xff]
  %v468 = vld [vmem:[%s461 + $0x30] sm:$0xff]
  %v469 = vld [vmem:[%s461 + $0x38] sm:$0xff]
  %v470 = vld [vmem:[%s461 + $0x40] sm:$0xff]
  %v471 = vld [vmem:[%s461 + $0x48] sm:$0xff]
  %v472 = vld [vmem:[%s461 + $0x50] sm:$0xff]
  %v473 = vld [vmem:[%s461 + $0x58] sm:$0xff]
  %v474 = vld [vmem:[%s461 + $0x60] sm:$0xff]
  %v475 = vld [vmem:[%s461 + $0x68] sm:$0xff]
  %v476 = vld [vmem:[%s461 + $0x70] sm:$0xff]
  %v477 = vld [vmem:[%s461 + $0x78] sm:$0xff]
  %478 = vmatprep.subr.mxu0 0.0
  %479 = vmatpush1.msra.mxu0 %v477
  %480 = vmatprep.subr.mxu0 0.0
  %481 = vmatpush1.msra.mxu0 %v476
  %482 = vmatprep.subr.mxu0 0.0
  %483 = vmatpush1.msra.mxu0 %v475
  %484 = vmatprep.subr.mxu0 0.0
  %485 = vmatpush1.msra.mxu0 %v474
  %486 = vmatprep.subr.mxu0 0.0
  %487 = vmatpush1.msra.mxu0 %v473
  %488 = vmatprep.subr.mxu0 0.0
  %489 = vmatpush1.msra.mxu0 %v472
  %490 = vmatprep.subr.mxu0 0.0
  %491 = vmatpush1.msra.mxu0 %v471
  %492 = vmatprep.subr.mxu0 0.0
  %493 = vmatpush1.msra.mxu0 %v470
  %494 = vmatprep.subr.mxu0 0.0
  %495 = vmatpush1.msra.mxu0 %v469
  %496 = vmatprep.subr.mxu0 0.0
  %497 = vmatpush1.msra.mxu0 %v468
  %498 = vmatprep.subr.mxu0 0.0
  %499 = vmatpush1.msra.mxu0 %v467
  %500 = vmatprep.subr.mxu0 0.0
  %501 = vmatpush1.msra.mxu0 %v466
  %502 = vmatprep.subr.mxu0 0.0
  %503 = vmatpush1.msra.mxu0 %v465
  %504 = vmatprep.subr.mxu0 0.0
  %505 = vmatpush1.msra.mxu0 %v464
  %506 = vmatprep.subr.mxu0 0.0
  %507 = vmatpush1.msra.mxu0 %v463
  %508 = vmatprep.subr.mxu0 0.0
  %509 = vmatpush1.msra.mxu0 %v462
  %510 = vmatprep.subr.mxu0 0.0
  %511 = vmatpush2.msra.mxu0 0.0
  %512 = vmatprep.subr.mxu0 0.0
  %513 = vmatpush2.msra.mxu0 0.0
  %514 = vmatprep.subr.mxu0 0.0
  %515 = vmatpush2.msra.mxu0 0.0
  %516 = vmatprep.subr.mxu0 0.0
  %517 = vmatpush2.msra.mxu0 0.0
  %518 = vmatprep.subr.mxu0 0.0
  %519 = vmatpush2.msra.mxu0 0.0
  %520 = vmatprep.subr.mxu0 0.0
  %521 = vmatpush2.msra.mxu0 0.0
  %522 = vmatprep.subr.mxu0 0.0
  %523 = vmatpush2.msra.mxu0 0.0
  %524 = vmatprep.subr.mxu0 0.0
  %525 = vmatpush2.msra.mxu0 0.0
  %526 = vmatprep.subr.mxu0 0.0
  %527 = vmatpush2.msra.mxu0 0.0
  %528 = vmatprep.subr.mxu0 0.0
  %529 = vmatpush2.msra.mxu0 0.0
  %530 = vmatprep.subr.mxu0 0.0
  %531 = vmatpush2.msra.mxu0 0.0
  %532 = vmatprep.subr.mxu0 0.0
  %533 = vmatpush2.msra.mxu0 0.0
  %534 = vmatprep.subr.mxu0 0.0
  %535 = vmatpush2.msra.mxu0 0.0
  %536 = vmatprep.subr.mxu0 0.0
  %537 = vmatpush2.msra.mxu0 0.0
  %538 = vmatprep.subr.mxu0 0.0
  %539 = vmatpush2.msra.mxu0 0.0
  %540 = vmatprep.subr.mxu0 0.0
  %541 = vmatpush2.msra.mxu0 0.0
  %542 = vmatprep.mubr.f32.mxu0 0.0
  %543 = vmatmul.mubr.f32.gmra.mxu0 %v449
  %v544 = vpop.f32.mrf.mxu0
  %v545 = vadd.f32 0.0, %v544
  %v546 = vpop.f32.mrf.mxu0
  %547 = vmatprep.mubr.f32.mxu0 0.0
  %548 = vmatmul.mubr.f32.gmra.mxu0 %v451
  %v549 = vpop.f32.mrf.mxu0
  %v550 = vadd.f32 0.0, %v549
  %v551 = vpop.f32.mrf.mxu0
  %552 = vmatprep.mubr.f32.mxu0 0.0
  %553 = vmatmul.mubr.f32.gmra.mxu0 %v454
  %v554 = vpop.f32.mrf.mxu0
  %v555 = vadd.f32 0.0, %v554
  %v556 = vpop.f32.mrf.mxu0
  %557 = vmatprep.mubr.f32.mxu0 0.0
  %558 = vmatmul.mubr.f32.gmra.mxu0 %v456
  %v559 = vpop.f32.mrf.mxu0
  %v560 = vadd.f32 0.0, %v559
  %v561 = vpop.f32.mrf.mxu0
  %562 = vdwg.mxu0
  %563 = vmatprep.subr.mxu0 0.0
  %564 = vmatpush1.msra.mxu0 %v440
  %565 = vmatprep.subr.mxu0 0.0
  %566 = vmatpush1.msra.mxu0 %v439
  %567 = vmatprep.subr.mxu0 0.0
  %568 = vmatpush1.msra.mxu0 %v438
  %569 = vmatprep.subr.mxu0 0.0
  %570 = vmatpush1.msra.mxu0 %v437
  %571 = vmatprep.subr.mxu0 0.0
  %572 = vmatpush1.msra.mxu0 %v436
  %573 = vmatprep.subr.mxu0 0.0
  %574 = vmatpush1.msra.mxu0 %v435
  %575 = vmatprep.subr.mxu0 0.0
  %576 = vmatpush1.msra.mxu0 %v434
  %577 = vmatprep.subr.mxu0 0.0
  %578 = vmatpush1.msra.mxu0 %v433
  %579 = vmatprep.subr.mxu0 0.0
  %580 = vmatpush1.msra.mxu0 %v432
  %581 = vmatprep.subr.mxu0 0.0
  %582 = vmatpush1.msra.mxu0 %v431
  %583 = vmatprep.subr.mxu0 0.0
  %584 = vmatpush1.msra.mxu0 %v430
  %585 = vmatprep.subr.mxu0 0.0
  %586 = vmatpush1.msra.mxu0 %v429
  %587 = vmatprep.subr.mxu0 0.0
  %588 = vmatpush1.msra.mxu0 %v428
  %589 = vmatprep.subr.mxu0 0.0
  %590 = vmatpush1.msra.mxu0 %v427
  %591 = vmatprep.subr.mxu0 0.0
  %592 = vmatpush1.msra.mxu0 %v426
  %593 = vmatprep.subr.mxu0 0.0
  %594 = vmatpush1.msra.mxu0 %v425
  %595 = vmatprep.subr.mxu0 0.0
  %596 = vmatpush2.msra.mxu0 0.0
  %597 = vmatprep.subr.mxu0 0.0
  %598 = vmatpush2.msra.mxu0 0.0
  %599 = vmatprep.subr.mxu0 0.0
  %600 = vmatpush2.msra.mxu0 0.0
  %601 = vmatprep.subr.mxu0 0.0
  %602 = vmatpush2.msra.mxu0 0.0
  %603 = vmatprep.subr.mxu0 0.0
  %604 = vmatpush2.msra.mxu0 0.0
  %605 = vmatprep.subr.mxu0 0.0
  %606 = vmatpush2.msra.mxu0 0.0
  %607 = vmatprep.subr.mxu0 0.0
  %608 = vmatpush2.msra.mxu0 0.0
  %609 = vmatprep.subr.mxu0 0.0
  %610 = vmatpush2.msra.mxu0 0.0
  %611 = vmatprep.subr.mxu0 0.0
  %612 = vmatpush2.msra.mxu0 0.0
  %613 = vmatprep.subr.mxu0 0.0
  %614 = vmatpush2.msra.mxu0 0.0
  %615 = vmatprep.subr.mxu0 0.0
  %616 = vmatpush2.msra.mxu0 0.0
  %617 = vmatprep.subr.mxu0 0.0
  %618 = vmatpush2.msra.mxu0 0.0
  %619 = vmatprep.subr.mxu0 0.0
  %620 = vmatpush2.msra.mxu0 0.0
  %621 = vmatprep.subr.mxu0 0.0
  %622 = vmatpush2.msra.mxu0 0.0
  %623 = vmatprep.subr.mxu0 0.0
  %624 = vmatpush2.msra.mxu0 0.0
  %625 = vmatprep.subr.mxu0 0.0
  %626 = vmatpush2.msra.mxu0 0.0
  %627 = vmatprep.mubr.f32.mxu0 0.0
  %628 = vmatmul.mubr.f32.gmra.mxu0 %v419
  %v629 = vpop.f32.mrf.mxu0
  %v630 = vadd.f32 %v545, %v629
  %v631 = vpop.f32.mrf.mxu0
  %632 = vmatprep.mubr.f32.mxu0 0.0
  %633 = vmatmul.mubr.f32.gmra.mxu0 %v420
  %v634 = vpop.f32.mrf.mxu0
  %v635 = vadd.f32 %v550, %v634
  %v636 = vpop.f32.mrf.mxu0
  %637 = vmatprep.mubr.f32.mxu0 0.0
  %638 = vmatmul.mubr.f32.gmra.mxu0 %v422
  %v639 = vpop.f32.mrf.mxu0
  %v640 = vadd.f32 %v555, %v639
  %v641 = vpop.f32.mrf.mxu0
  %642 = vmatprep.mubr.f32.mxu0 0.0
  %643 = vmatmul.mubr.f32.gmra.mxu0 %v423
  %v644 = vpop.f32.mrf.mxu0
  %v645 = vadd.f32 %v560, %v644
  %v646 = vpop.f32.mrf.mxu0
  %647 = vdwg.mxu0
  %v648 = vrot.slane %v419, 2
  %v649 = vrot.slane %v420, 2
  %v650 = vsel %vm268, %v648, %v649
  %v651 = vrot.slane %v421, 2
  %v652 = vsel %vm268, %v649, %v651
  %v653 = vrot.slane %v422, 2
  %v654 = vrot.slane %v423, 2
  %v655 = vsel %vm268, %v653, %v654
  %v656 = vrot.slane %v424, 2
  %v657 = vsel %vm268, %v654, %v656
  %s662 = scalar_lea.vmem %s2, 256
  %v663 = vld [vmem:[%s662] sm:$0xff]
  %v664 = vld [vmem:[%s662 + $0x8] sm:$0xff]
  %v665 = vld [vmem:[%s662 + $0x10] sm:$0xff]
  %v666 = vld [vmem:[%s662 + $0x18] sm:$0xff]
  %v667 = vld [vmem:[%s662 + $0x20] sm:$0xff]
  %v668 = vld [vmem:[%s662 + $0x28] sm:$0xff]
  %v669 = vld [vmem:[%s662 + $0x30] sm:$0xff]
  %v670 = vld [vmem:[%s662 + $0x38] sm:$0xff]
  %v671 = vld [vmem:[%s662 + $0x40] sm:$0xff]
  %v672 = vld [vmem:[%s662 + $0x48] sm:$0xff]
  %v673 = vld [vmem:[%s662 + $0x50] sm:$0xff]
  %v674 = vld [vmem:[%s662 + $0x58] sm:$0xff]
  %v675 = vld [vmem:[%s662 + $0x60] sm:$0xff]
  %v676 = vld [vmem:[%s662 + $0x68] sm:$0xff]
  %v677 = vld [vmem:[%s662 + $0x70] sm:$0xff]
  %v678 = vld [vmem:[%s662 + $0x78] sm:$0xff]
  %679 = vmatprep.subr.mxu0 0.0
  %680 = vmatpush1.msra.mxu0 %v678
  %681 = vmatprep.subr.mxu0 0.0
  %682 = vmatpush1.msra.mxu0 %v677
  %683 = vmatprep.subr.mxu0 0.0
  %684 = vmatpush1.msra.mxu0 %v676
  %685 = vmatprep.subr.mxu0 0.0
  %686 = vmatpush1.msra.mxu0 %v675
  %687 = vmatprep.subr.mxu0 0.0
  %688 = vmatpush1.msra.mxu0 %v674
  %689 = vmatprep.subr.mxu0 0.0
  %690 = vmatpush1.msra.mxu0 %v673
  %691 = vmatprep.subr.mxu0 0.0
  %692 = vmatpush1.msra.mxu0 %v672
  %693 = vmatprep.subr.mxu0 0.0
  %694 = vmatpush1.msra.mxu0 %v671
  %695 = vmatprep.subr.mxu0 0.0
  %696 = vmatpush1.msra.mxu0 %v670
  %697 = vmatprep.subr.mxu0 0.0
  %698 = vmatpush1.msra.mxu0 %v669
  %699 = vmatprep.subr.mxu0 0.0
  %700 = vmatpush1.msra.mxu0 %v668
  %701 = vmatprep.subr.mxu0 0.0
  %702 = vmatpush1.msra.mxu0 %v667
  %703 = vmatprep.subr.mxu0 0.0
  %704 = vmatpush1.msra.mxu0 %v666
  %705 = vmatprep.subr.mxu0 0.0
  %706 = vmatpush1.msra.mxu0 %v665
  %707 = vmatprep.subr.mxu0 0.0
  %708 = vmatpush1.msra.mxu0 %v664
  %709 = vmatprep.subr.mxu0 0.0
  %710 = vmatpush1.msra.mxu0 %v663
  %711 = vmatprep.subr.mxu0 0.0
  %712 = vmatpush2.msra.mxu0 0.0
  %713 = vmatprep.subr.mxu0 0.0
  %714 = vmatpush2.msra.mxu0 0.0
  %715 = vmatprep.subr.mxu0 0.0
  %716 = vmatpush2.msra.mxu0 0.0
  %717 = vmatprep.subr.mxu0 0.0
  %718 = vmatpush2.msra.mxu0 0.0
  %719 = vmatprep.subr.mxu0 0.0
  %720 = vmatpush2.msra.mxu0 0.0
  %721 = vmatprep.subr.mxu0 0.0
  %722 = vmatpush2.msra.mxu0 0.0
  %723 = vmatprep.subr.mxu0 0.0
  %724 = vmatpush2.msra.mxu0 0.0
  %725 = vmatprep.subr.mxu0 0.0
  %726 = vmatpush2.msra.mxu0 0.0
  %727 = vmatprep.subr.mxu0 0.0
  %728 = vmatpush2.msra.mxu0 0.0
  %729 = vmatprep.subr.mxu0 0.0
  %730 = vmatpush2.msra.mxu0 0.0
  %731 = vmatprep.subr.mxu0 0.0
  %732 = vmatpush2.msra.mxu0 0.0
  %733 = vmatprep.subr.mxu0 0.0
  %734 = vmatpush2.msra.mxu0 0.0
  %735 = vmatprep.subr.mxu0 0.0
  %736 = vmatpush2.msra.mxu0 0.0
  %737 = vmatprep.subr.mxu0 0.0
  %738 = vmatpush2.msra.mxu0 0.0
  %739 = vmatprep.subr.mxu0 0.0
  %740 = vmatpush2.msra.mxu0 0.0
  %741 = vmatprep.subr.mxu0 0.0
  %742 = vmatpush2.msra.mxu0 0.0
  %743 = vmatprep.mubr.f32.mxu0 0.0
  %744 = vmatmul.mubr.f32.gmra.mxu0 %v650
  %v745 = vpop.f32.mrf.mxu0
  %v746 = vadd.f32 0.0, %v745
  %v747 = vpop.f32.mrf.mxu0
  %748 = vmatprep.mubr.f32.mxu0 0.0
  %749 = vmatmul.mubr.f32.gmra.mxu0 %v652
  %v750 = vpop.f32.mrf.mxu0
  %v751 = vadd.f32 0.0, %v750
  %v752 = vpop.f32.mrf.mxu0
  %753 = vmatprep.mubr.f32.mxu0 0.0
  %754 = vmatmul.mubr.f32.gmra.mxu0 %v655
  %v755 = vpop.f32.mrf.mxu0
  %v756 = vadd.f32 0.0, %v755
  %v757 = vpop.f32.mrf.mxu0
  %758 = vmatprep.mubr.f32.mxu0 0.0
  %759 = vmatmul.mubr.f32.gmra.mxu0 %v657
  %v760 = vpop.f32.mrf.mxu0
  %v761 = vadd.f32 0.0, %v760
  %v762 = vpop.f32.mrf.mxu0
  %763 = vdwg.mxu0
  %v764 = vadd.f32 %v630, %v746
  %v765 = vadd.f32 %v635, %v751
  %v766 = vadd.f32 %v640, %v756
  %v767 = vadd.f32 %v645, %v761
  %v768 = vld [vmem:[%s5] sm:$0x1]
  %v770 = vlaneseq
  %v771 = vshrl.u32 %v770, 7
  %v772 = vsub.s32 0, %v771
  %v773 = vrot.slane %v768, %v772
  %v775 = vmul.f32 %v764, %v773
  %v776 = vmul.f32 %v765, %v773
  %v777 = vmul.f32 %v766, %v773
  %v778 = vmul.f32 %v767, %v773
  %v779 = vld [vmem:[%s6] sm:$0x1]
  %v781 = vlaneseq
  %v782 = vshrl.u32 %v781, 7
  %v783 = vsub.s32 0, %v782
  %v784 = vrot.slane %v779, %v783
  %v786 = vadd.f32 %v775, %v784
  %v787 = vadd.f32 %v776, %v784
  %v788 = vadd.f32 %v777, %v784
  %v789 = vadd.f32 %v778, %v784
  %v790 = vadd.f32 %v786, %v30
  %v791 = vadd.f32 %v787, %v31
  %v792 = vadd.f32 %v788, %v32
  %v793 = vadd.f32 %v789, %v33
  %v794 = vmax.f32 %v790, 0.0
  %v795 = vmax.f32 %v791, 0.0
  %v796 = vmax.f32 %v792, 0.0
  %v797 = vmax.f32 %v793, 0.0
  %798 = vst [vmem:[%s7] sm:$0xff] %v794
  %799 = vst [vmem:[%s7 + $0x8] sm:$0xff] %v795
  %800 = vst [vmem:[%s7 + $0x10] sm:$0xff] %v796
  %801 = vst [vmem:[%s7 + $0x18] sm:$0xff] %v797
  // Predicated region
  $region30: #{residual_block.1} parent=0 // pred_check
    _
  $region31: #{residual_block.1} parent=0 // pred_check_branch
    %803 = sbr.rel (0) target = $region33
  $region32: #{residual_block.1} parent=0 // pred_region
    _
  $region33: #{residual_block.1} parent=0 // pred_fallthru
    _
  // Predicated region
  $region34: #{residual_block.1} parent=0 // pred_check
    _
  $region35: #{residual_block.1} parent=0 // pred_check_branch
    %805 = sbr.rel (0) target = $region37
  $region36: #{residual_block.1} parent=0 // pred_region
    _
  $region37: #{residual_block.1} parent=0 // pred_fallthru
    _

</llo_original>
